<compile_context>
chip_gen: v7x
topology: tpu7x:2x2x1
jax: 0.10.0
libtpu: 0.0.40
codegen_flags: <defaults>
</compile_context>

<pallas_src>
import functools

import jax
import jax.numpy as jnp
from jax.experimental import pallas as pl
from jax.experimental.pallas import tpu as pltpu

_LANE = 128
_SUBLANE = 8
_TILE = _LANE * _SUBLANE  # 1024 f32 = one full vreg


def _learnable_mask_kernel(x_ref, w_ref, o_ref, *, n_real):
    """x_ref: (TB, rows, 128) subjects; w_ref: (rows, 128) pre-shifted mask (W - min W)."""
    x = x_ref[...]
    w = w_ref[...]

    t = x * w[None, :, :]                       # padded entries are exactly 0.0
    # Per-subject mean over the real element count (padding contributes 0 to the sum).
    mean = jnp.sum(t, axis=(1, 2), keepdims=True) * (1.0 / n_real)
    o_ref[...] = (t > mean).astype(o_ref.dtype)


def learnable_mask_forward(cbt_subject, weights_mask, *, target_block_bytes=4 << 20):
    """cbt_subject: [N, N] or [B, N, N]; weights_mask: [N, N].

    Returns a {0., 1.} float32 array with the same (un-padded) shape as cbt_subject.
    """
    cbt_subject = jnp.asarray(cbt_subject, jnp.float32)
    weights_mask = jnp.asarray(weights_mask, jnp.float32)

    squeeze_batch = cbt_subject.ndim == 2
    if squeeze_batch:
        cbt_subject = cbt_subject[None]
    b, n, n2 = cbt_subject.shape
    assert n == n2 and weights_mask.shape == (n, n)

    n_real = n * n
    n_pad = (-n_real) % _TILE
    total = n_real + n_pad
    rows = total // _LANE                       # multiple of 8 by construction

    # One-time shared-mask prep (hoisted out of the kernel body).
    w_shifted = (weights_mask - jnp.min(weights_mask)).reshape(n_real)

    x = cbt_subject.reshape(b, n_real)
    if n_pad:
        # Lane-dense layout needs a multiple of 1024 elems/subject. Zero padding
        # contributes 0 to sum(x * w_shifted); padded outputs are sliced off below.
        x = jnp.pad(x, ((0, 0), (0, n_pad)))
        w_shifted = jnp.pad(w_shifted, (0, n_pad))

    # Batch-block subjects: multi-MiB per grid step to amortize ~0.35us/step overhead,
    # while keeping 2*(x block) + 2*(o block) + w comfortably inside v7x's 64 MiB VMEM.
    per_subj_bytes = rows * _LANE * 4
    tb = max(1, min(b, target_block_bytes // per_subj_bytes))
    if b > 1 and tb >= b:
        tb = pl.cdiv(b, 2)                      # >=2 grid steps so both TCs get work
    b_pad = pl.cdiv(b, tb) * tb
    if b_pad > b:
        x = jnp.pad(x, ((0, b_pad - b), (0, 0)))

    x = x.reshape(b_pad, rows, _LANE)
    w2 = w_shifted.reshape(rows, _LANE)

    # Explicit VMEM limit: above the 16/32 MiB scoped defaults, below v7x's 64 MiB.
    vmem_needed = 4 * tb * per_subj_bytes + rows * _LANE * 4
    vmem_limit = int(min(max(vmem_needed * 5 // 4, 32 << 20), 56 << 20))

    kernel = functools.partial(_learnable_mask_kernel, n_real=n_real)
    out = pl.pallas_call(
        kernel,
        out_shape=jax.ShapeDtypeStruct((b_pad, rows, _LANE), jnp.float32),
        grid=(b_pad // tb,),
        in_specs=[
            pl.BlockSpec((tb, rows, _LANE), lambda i: (i, 0, 0)),   # subject block
            pl.BlockSpec((rows, _LANE), lambda i: (0, 0)),          # shared mask, resident
        ],
        out_specs=pl.BlockSpec((tb, rows, _LANE), lambda i: (i, 0, 0)),
        compiler_params=pltpu.CompilerParams(
            dimension_semantics=("parallel",),
            vmem_limit_bytes=vmem_limit,
        ),
    )(x, w2)

    out = out.reshape(b_pad, total)[:b, :n_real].reshape(b, n, n)
    if squeeze_batch:
        out = out[0]
    return out


def _reference(cbt_subject, weights_mask):
    """Faithful port of the PyTorch forward (incl. unbiased std, sigmoid, threshold)."""
    w = weights_mask
    norm_w = (w - jnp.min(w)) / (jnp.max(w) - jnp.min(w))
    out = cbt_subject * norm_w
    n_elems = out.size
    mean = jnp.mean(out)
    std = jnp.sqrt(jnp.sum((out - mean) ** 2) / (n_elems - 1))
    out = (out - mean) / std
    out = jax.nn.sigmoid(out)
    return jnp.where(out > 0.5, 1.0, 0.0)


if __name__ == "__main__":
    num_nodes = 32
    batch = 2

    key = jax.random.PRNGKey(0)
    k_cbt, k_w = jax.random.split(key)

    # Batch of CBT subject connectivity matrices.
    cbt_batch = jax.random.normal(k_cbt, (batch, num_nodes, num_nodes), dtype=jnp.float32)
    # Deterministic parameter init, mirroring nn.Parameter(torch.randn(N, N)).
    weights_mask = jax.random.normal(k_w, (num_nodes, num_nodes), dtype=jnp.float32)

    out = jax.block_until_ready(learnable_mask_forward(cbt_batch, weights_mask))
    ref = jax.vmap(lambda c: _reference(c, weights_mask))(cbt_batch)

    assert out.shape == (batch, num_nodes, num_nodes)
    assert bool(jnp.all((out == 0.0) | (out == 1.0)))
    # Algebraic collapse is exact in real arithmetic; tolerate rare near-tie flips
    # caused by the reference's extra divisions before the threshold.
    agree = float(jnp.mean((out == ref).astype(jnp.float32)))
    assert agree >= 0.999, agree

    # Unbatched path mirrors the original module signature ([N, N] in, [N, N] out).
    out_single = jax.block_until_ready(learnable_mask_forward(cbt_batch[0], weights_mask))
    assert out_single.shape == (num_nodes, num_nodes)
    assert float(jnp.mean((out_single == ref[0]).astype(jnp.float32))) >= 0.999

    print("KERNEL_OK")
</pallas_src>

<mosaic_0001>
module attributes {stable_mosaic.version = 11 : i64} {
  func.func @_learnable_mask_kernel(%arg0: i32, %arg1: memref<1x8x128xf32, #tpu.memory_space<vmem>>, %arg2: memref<8x128xf32, #tpu.memory_space<vmem>>, %arg3: memref<1x8x128xf32, #tpu.memory_space<vmem>>) attributes {dimension_semantics = [#tpu.dimension_semantics<parallel>], iteration_bounds = array<i64: 2>, scalar_prefetch = 0 : i64, scratch_operands = 0 : i64, tpu.core_type = #tpu.core_type<tc>, window_params = [{transform_indices = @transform_0, window_bounds = array<i64: 1, 8, 128>}, {pipeline_mode = #tpu.pipeline_mode<synchronous>, transform_indices = @transform_1, window_bounds = array<i64: 8, 128>}, {transform_indices = @transform_2, window_bounds = array<i64: 1, 8, 128>}]} {
    %c0 = arith.constant 0 : index
    %c0_0 = arith.constant 0 : index
    %c0_1 = arith.constant 0 : index
    %0 = vector.load %arg1[%c0, %c0_0, %c0_1] : memref<1x8x128xf32, #tpu.memory_space<vmem>>, vector<1x8x128xf32>
    %c0_2 = arith.constant 0 : index
    %c0_3 = arith.constant 0 : index
    %1 = vector.load %arg2[%c0_2, %c0_3] : memref<8x128xf32, #tpu.memory_space<vmem>>, vector<8x128xf32>
    %2 = vector.shape_cast %1 : vector<8x128xf32> to vector<1x8x128xf32>
    %3 = arith.mulf %0, %2 : vector<1x8x128xf32>
    %cst = arith.constant dense<0.000000e+00> : vector<1xf32>
    %4 = vector.multi_reduction <add>, %3, %cst [1, 2] : vector<1x8x128xf32> to vector<1xf32>
    %5 = vector.shape_cast %4 : vector<1xf32> to vector<1x1x1xf32>
    %cst_4 = arith.constant 9.765625E-4 : f32
    %6 = vector.broadcast %cst_4 : f32 to vector<1x1x1xf32>
    %7 = arith.mulf %5, %6 : vector<1x1x1xf32>
    %8 = vector.broadcast %7 : vector<1x1x1xf32> to vector<1x8x128xf32>
    %9 = arith.cmpf ogt, %3, %8 : vector<1x8x128xf32>
    %10 = arith.extui %9 : vector<1x8x128xi1> to vector<1x8x128xi32>
    %11 = arith.sitofp %10 : vector<1x8x128xi32> to vector<1x8x128xf32>
    %c0_5 = arith.constant 0 : index
    %c0_6 = arith.constant 0 : index
    %c0_7 = arith.constant 0 : index
    %12 = vector.load %arg3[%c0_5, %c0_6, %c0_7] : memref<1x8x128xf32, #tpu.memory_space<vmem>>, vector<1x8x128xf32>
    tpu.vector_store %arg3[%c0_5, %c0_6, %c0_7], %11 {strides = array<i32>} : memref<1x8x128xf32, #tpu.memory_space<vmem>>, vector<1x8x128xf32>,
    return
  }
  func.func @transform_0(%arg0: i32) -> (i32, i32, i32) {
    %c0_i32 = arith.constant 0 : i32
    %c0_i32_0 = arith.constant 0 : i32
    %c0_i32_1 = arith.constant 0 : i32
    return %arg0, %c0_i32, %c0_i32_0 : i32, i32, i32
  }
  func.func @transform_1(%arg0: i32) -> (i32, i32) {
    %c0_i32 = arith.constant 0 : i32
    %c0_i32_0 = arith.constant 0 : i32
    %c0_i32_1 = arith.constant 0 : i32
    return %c0_i32, %c0_i32_0 : i32, i32
  }
  func.func @transform_2(%arg0: i32) -> (i32, i32, i32) {
    %c0_i32 = arith.constant 0 : i32
    %c0_i32_0 = arith.constant 0 : i32
    %c0_i32_1 = arith.constant 0 : i32
    return %arg0, %c0_i32, %c0_i32_0 : i32, i32, i32
  }
}

</mosaic_0001>

<llo_original>
// kernel: tpu_custom_call.1
$region0: #{tpu_custom_call.1}
  #allocation0 [shape = 'u32[]', space=smem, size = 0x4, offset = 0x4, fixed_abs, tag = 'smem constant byte address 0x4 - core index']
  #allocation1 [shape = 'u32[144,128]{1,0:T(1,128)}', space=vmem, size = 0x12000, scoped, tag = 'internal scratch']
  %s0 = inlined_call_operand.hbm [shape: f32[2,8,128], index: 0, kind: input, shape index: {}]
  %s1 = inlined_call_operand.hbm [shape: f32[8,128], index: 1, kind: input, shape index: {}]
  %s2 = inlined_call_operand.hbm [shape: f32[2,8,128], index: 2, kind: output, shape index: {}]
  %s3 = sld [smem:[#allocation0]]
  $region49: #{tpu_custom_call.1} parent=0
    _
  %s5 = ssub.s32 1, %s3
  %s6 = scalar_select 0, %s5, %s3
  $region1: #{tpu_custom_call.1} parent=0
    #allocation2 [shape = 'u8[8192]{0}', space=vmem, size = 0x2000, scoped, tag = 'input window, operand 0']
    #allocation3 [shape = 's32[2]{0}', space=sflag, size = 0x8, scoped, tag = 'scoped memory for tpu_custom_call.1']
    #allocation4 [shape = 's32[2]{0}', space=sflag, size = 0x8, scoped, tag = 'scoped memory for tpu_custom_call.1']
    #allocation5 [shape = 'u8[4096]{0}', space=vmem, size = 0x1000, scoped, tag = 'input window, operand 1, single buffered']
    #allocation6 [shape = 's32[1]{0}', space=sflag, size = 0x4, scoped, tag = 'scoped memory for tpu_custom_call.1']
    #allocation7 [shape = 'u8[8192]{0}', space=vmem, size = 0x2000, scoped, tag = 'output window, operand 0']
    %7 = vsyncpa [#allocation3], 0
    %s8 = scalar_lea.sflag [#allocation3], 1
    %9 = vsyncpa %s8, 0
    %10 = vsyncpa [#allocation6], 0
    %11 = vsyncpa [#allocation4], 0
    %s12 = scalar_lea.sflag [#allocation4], 1
    %13 = vsyncpa %s12, 0
    loop: start=0, step=1, limit=4
    $region2: #{tpu_custom_call.1} parent=1 // loop_pre_header
      _
    $region3: #{tpu_custom_call.1} parent=1 // loop_header
      %s15 = sphi 0, %s19
      %p16 = scmp.ge.s32.totalorder %s15, 4
      %s25 = sphi 0, %s27
      %s28 = sphi 0, %s25
      %s29 = sphi 0, %s28
      %s45 = sphi 0, %s29
      %s49 = sphi 0, %s49
      %s51 = sphi 0, %s49
      %s52 = sphi 0, %s51
      %s66 = sphi 0, %s52
      %s72 = sphi 0, %s74
      %s75 = sphi 0, %s72
      %s76 = sphi 0, %s75
      %s92 = sphi 0, %s76
    $region4: #{tpu_custom_call.1} parent=1 // loop_header_branch
      %18 = sbr.rel (%p16) target = $region8
    $region5: #{tpu_custom_call.1} parent=1 // loop_body
      %s20 = ssub.s32 %s15, 1
      %s21 = ssub.s32 %s15, 2
      %s22 = sadd.s32 %s15, 1
      %s23 = ssub.s32 %s15, %s22
      %p24 = scmp.eq.s32.totalorder %s23, 0
      %s26 = sadd.s32 %s25, 1
      %s27 = scalar_select %p24, %s25, %s26
      %p30 = pneg %p24
      %p31 = scmp.eq.s32.totalorder %s15, 1
      %p32 = por %p30, %p31
      %p33 = scmp.ne.s32.totalorder %s25, %s28
      %p34 = scmp.eq.s32.totalorder %s15, 0
      %p35 = por %p33, %p34
      %p36 = scmp.ne.s32.totalorder %s25, %s28
      %p37 = scmp.eq.s32.totalorder %s20, 1
      %p38 = por %p36, %p37
      %p39 = scmp.ne.s32.totalorder %s28, %s29
      %p40 = scmp.eq.s32.totalorder %s20, 0
      %p41 = por %p39, %p40
      %p42 = scmp.ne.s32.totalorder %s28, %s29
      %p43 = scmp.eq.s32.totalorder %s21, 1
      %p44 = por %p42, %p43
      %p46 = scmp.ne.s32.totalorder %s29, %s45
      %p47 = scmp.eq.s32.totalorder %s21, 0
      %p48 = por %p46, %p47
      %s50 = sadd.s32 %s49, 1
      %p53 = scmp.eq.s32.totalorder %s15, 1
      %p54 = scmp.ne.s32.totalorder %s49, %s51
      %p55 = scmp.eq.s32.totalorder %s15, 0
      %p56 = por %p54, %p55
      %p57 = scmp.ne.s32.totalorder %s49, %s51
      %p58 = scmp.eq.s32.totalorder %s20, 1
      %p59 = por %p57, %p58
      %p60 = scmp.ne.s32.totalorder %s51, %s52
      %p61 = scmp.eq.s32.totalorder %s20, 0
      %p62 = por %p60, %p61
      %p63 = scmp.ne.s32.totalorder %s51, %s52
      %p64 = scmp.eq.s32.totalorder %s21, 1
      %p65 = por %p63, %p64
      %p67 = scmp.ne.s32.totalorder %s52, %s66
      %p68 = scmp.eq.s32.totalorder %s21, 0
      %p69 = por %p67, %p68
      %s70 = ssub.s32 %s15, %s22
      %p71 = scmp.eq.s32.totalorder %s70, 0
      %s73 = sadd.s32 %s72, 1
      %s74 = scalar_select %p71, %s72, %s73
      %p77 = pneg %p71
      %p78 = scmp.eq.s32.totalorder %s15, 1
      %p79 = por %p77, %p78
      %p80 = scmp.ne.s32.totalorder %s72, %s75
      %p81 = scmp.eq.s32.totalorder %s15, 0
      %p82 = por %p80, %p81
      %p83 = scmp.ne.s32.totalorder %s72, %s75
      %p84 = scmp.eq.s32.totalorder %s20, 1
      %p85 = por %p83, %p84
      %p86 = scmp.ne.s32.totalorder %s75, %s76
      %p87 = scmp.eq.s32.totalorder %s20, 0
      %p88 = por %p86, %p87
      %p89 = scmp.ne.s32.totalorder %s75, %s76
      %p90 = scmp.eq.s32.totalorder %s21, 1
      %p91 = por %p89, %p90
      %p93 = scmp.ne.s32.totalorder %s76, %s92
      %p94 = scmp.eq.s32.totalorder %s21, 0
      %p95 = por %p93, %p94
      %p96 = scmp.le.s32.totalorder 1, %s15
      %p97 = scmp.lt.s32.totalorder %s15, 3
      %p98 = pnand %p96, %p97
      %p99 = pneg %p98
      // Predicated region
      $region9: #{tpu_custom_call.1} parent=5 // pred_check
        _
      $region10: #{tpu_custom_call.1} parent=5 // pred_check_branch
        %101 = sbr.rel (%p98) target = $region12
      $region11: #{tpu_custom_call.1} parent=5 // pred_region
        %s102 = ssub.s32 %s15, 1
        // Predicated region
        $region13: #{tpu_custom_call.1} parent=11 // pred_check
          %p103 = pneg %p62
        $region14: #{tpu_custom_call.1} parent=11 // pred_check_branch
          %105 = sbr.rel (%p103) target = $region16
        $region15: #{tpu_custom_call.1} parent=11 // pred_region
          %s107 = ssub.s32 128, 128
          %108 = vsyncadd [#allocation6], %s107
          %s110 = sshll.u32 [#allocation5], 4
          %s111 = int_to_ptr.vmem [resolvable:$true] %s110
          %113 = dma.hbm_to_vmem [thread:$0]  %s1, 128, %s111, [#allocation6]
        $region16: #{tpu_custom_call.1} parent=11 // pred_fallthru
          _
      $region12: #{tpu_custom_call.1} parent=5 // pred_fallthru
        _
      %p114 = scmp.lt.s32.totalorder %s15, 2
      // Predicated region
      $region17: #{tpu_custom_call.1} parent=5 // pred_check
        %p115 = pneg %p114
      $region18: #{tpu_custom_call.1} parent=5 // pred_check_branch
        %117 = sbr.rel (%p115) target = $region20
      $region19: #{tpu_custom_call.1} parent=5 // pred_region
        // Predicated region
        $region21: #{tpu_custom_call.1} parent=19 // pred_check
          %p118 = pneg %p35
        $region22: #{tpu_custom_call.1} parent=19 // pred_check_branch
          %120 = sbr.rel (%p118) target = $region24
        $region23: #{tpu_custom_call.1} parent=19 // pred_region
          %s121 = sand.u32 %s25, 1
          %s122 = scalar_lea.sflag [#allocation3], %s121
          %s123 = sand.u32 %s25, 1
          %s124 = smul.addr %s123, 8
          %s125 = scalar_lea.vmem [#allocation2], %s124
          %s127 = ssub.s32 128, 128
          %128 = vsyncadd %s122, %s127
          %s129 = smul.addr %s15, 128
          %s130 = scalar_lea.hbm %s0, %s129
          %s132 = sshll.u32 %s125, 4
          %s133 = int_to_ptr.vmem [resolvable:$true] %s132
          %135 = dma.hbm_to_vmem [thread:$0]  %s130, 128, %s133, %s122
        $region24: #{tpu_custom_call.1} parent=19 // pred_fallthru
          _
      $region20: #{tpu_custom_call.1} parent=5 // pred_fallthru
        _
      %p136 = scmp.le.s32.totalorder 1, %s15
      %p137 = scmp.lt.s32.totalorder %s15, 3
      %p138 = pnand %p136, %p137
      %p139 = pneg %p138
      // Predicated region
      $region25: #{tpu_custom_call.1} parent=5 // pred_check
        _
      $region26: #{tpu_custom_call.1} parent=5 // pred_check_branch
        %141 = sbr.rel (%p138) target = $region28
      $region27: #{tpu_custom_call.1} parent=5 // pred_region
        %s142 = ssub.s32 %s15, 1
        %s143 = sand.u32 %s28, 1
        %s144 = scalar_lea.sflag [#allocation3], %s143
        %s145 = sand.u32 %s28, 1
        %s146 = smul.addr %s145, 8
        %s147 = scalar_lea.vmem [#allocation2], %s146
        // Predicated region
        $region29: #{tpu_custom_call.1} parent=27 // pred_check
          %p148 = pneg %p41
        $region30: #{tpu_custom_call.1} parent=27 // pred_check_branch
          %150 = sbr.rel (%p148) target = $region32
        $region31: #{tpu_custom_call.1} parent=27 // pred_region
          %151 = dma.done %s144, 128
        $region32: #{tpu_custom_call.1} parent=27 // pred_fallthru
          _
        // Predicated region
        $region33: #{tpu_custom_call.1} parent=27 // pred_check
          %p152 = pneg %p62
        $region34: #{tpu_custom_call.1} parent=27 // pred_check_branch
          %154 = sbr.rel (%p152) target = $region36
        $region35: #{tpu_custom_call.1} parent=27 // pred_region
          %155 = dma.done [#allocation6], 128
        $region36: #{tpu_custom_call.1} parent=27 // pred_fallthru
          _
        %s156 = sand.u32 %s28, 1
        %s157 = scalar_lea.sflag [#allocation3], %s156
        %s158 = sand.u32 %s28, 1
        %s159 = smul.addr %s158, 8
        %s160 = scalar_lea.vmem [#allocation2], %s159
        %p161 = pneg %p41
        %p162 = pneg %p38
        %p163 = pneg %p62
        %p164 = pneg %p59
        %p165 = pneg %p88
        %p166 = pneg %p85
        %s167 = sand.u32 %s75, 1
        %s168 = scalar_lea.sflag [#allocation4], %s167
        %s169 = sand.u32 %s75, 1
        %s170 = smul.addr %s169, 8
        %s171 = scalar_lea.vmem [#allocation7], %s170
        %v172 = vld [vmem:[%s147] sm:$0xff]
        %v173 = vld [vmem:[#allocation5] sm:$0xff]
        %v174 = vmul.f32 %v172, %v173
        %175 = vadd.xlane.f32.xlu0 %v174
        %v176 = vpop.xlane.xlu0 %175
        %v177 = vrot.slane %v176, 4
        %v178 = vadd.f32 %v176, %v177
        %v179 = vrot.slane %v178, 2
        %v180 = vadd.f32 %v178, %v179
        %v181 = vrot.slane %v180, 1
        %v182 = vadd.f32 %v180, %v181
        %v183 = vmul.f32 %v182, 0.0009765625
        %vm184 = vcmp.gt.f32.partialorder %v174, %v183
        %v185 = vsel %vm184, 1, 0
        %v186 = vcvt.s32.f32 %v185
        %187 = vst [vmem:[%s171] sm:$0xff] %v186
        %s188 = sand.u32 %s75, 1
        %s189 = scalar_lea.sflag [#allocation4], %s188
        %s190 = sand.u32 %s75, 1
        %s191 = smul.addr %s190, 8
        %s192 = scalar_lea.vmem [#allocation7], %s191
        // Predicated region
        $region37: #{tpu_custom_call.1} parent=27 // pred_check
          %p193 = pneg %p85
        $region38: #{tpu_custom_call.1} parent=27 // pred_check_branch
          %195 = sbr.rel (%p193) target = $region40
        $region39: #{tpu_custom_call.1} parent=27 // pred_region
          %s197 = ssub.s32 128, 128
          %198 = vsyncadd %s189, %s197
          %s199 = smul.addr %s20, 128
          %s200 = scalar_lea.hbm %s2, %s199
          %s202 = sshll.u32 %s192, 4
          %s203 = int_to_ptr.vmem [resolvable:$true] %s202
          %205 = dma.vmem_to_hbm [thread:$0]  %s203, 128, %s200, %s189
        $region40: #{tpu_custom_call.1} parent=27 // pred_fallthru
          _
      $region28: #{tpu_custom_call.1} parent=5 // pred_fallthru
        _
      %p206 = scmp.le.s32.totalorder 2, %s15
      // Predicated region
      $region41: #{tpu_custom_call.1} parent=5 // pred_check
        %p207 = pneg %p206
      $region42: #{tpu_custom_call.1} parent=5 // pred_check_branch
        %209 = sbr.rel (%p207) target = $region44
      $region43: #{tpu_custom_call.1} parent=5 // pred_region
        %s210 = ssub.s32 %s15, 2
        // Predicated region
        $region45: #{tpu_custom_call.1} parent=43 // pred_check
          %p211 = pneg %p91
        $region46: #{tpu_custom_call.1} parent=43 // pred_check_branch
          %213 = sbr.rel (%p211) target = $region48
        $region47: #{tpu_custom_call.1} parent=43 // pred_region
          %s214 = sand.u32 %s76, 1
          %s215 = scalar_lea.sflag [#allocation4], %s214
          %s216 = sand.u32 %s76, 1
          %s217 = smul.addr %s216, 8
          %s218 = scalar_lea.vmem [#allocation7], %s217
          %219 = dma.done %s215, 128
        $region48: #{tpu_custom_call.1} parent=43 // pred_fallthru
          _
      $region44: #{tpu_custom_call.1} parent=5 // pred_fallthru
        _
    $region6: #{tpu_custom_call.1} parent=1 // loop_footer
      %s19 = sadd.s32 1, %s15
    $region7: #{tpu_custom_call.1} parent=1 // loop_footer_branch
      %14 = sbr.rel target = $region3
    $region8: #{tpu_custom_call.1} parent=1 // loop_exit
      _
    %220 = vsyncpa [#allocation3], 1
    %s221 = scalar_lea.sflag [#allocation3], 1
    %222 = vsyncpa %s221, 1
    %223 = vsyncpa [#allocation6], 1
    %224 = vsyncpa [#allocation4], 1
    %s225 = scalar_lea.sflag [#allocation4], 1
    %226 = vsyncpa %s225, 1

</llo_original>
